<compile_context>
chip_gen: v6e
topology: v6e:2x2x1
jax: 0.10.0
libtpu: 0.0.40
codegen_flags: <defaults>
</compile_context>

<pallas_src>
import functools

import jax
import jax.numpy as jnp
from jax import lax
from jax.experimental import pallas as pl
from jax.experimental.pallas import tpu as pltpu

_LANES = 128            # vreg lane width
_SUBLANES = 8           # f32 vreg sublane count
_MAX_BLOCK_ROWS = 2048  # 2048x128 f32 = 1 MiB per input per pipeline buffer
_NEG_CLAMP = -100.0     # PyTorch BCE clamps log terms at -100


def _bce_partial_kernel(p_ref, y_ref, out_ref, *, block_rows, rows, hard_labels):
    """One grid step: (block_rows, 128) tile -> (8, 128) partial BCE sum."""
    i = pl.program_id(0)
    base_row = i * block_rows
    n_groups = block_rows // _SUBLANES
    need_mask = (rows % block_rows) != 0   # static Python bool

    def group_bce(g):
        r0 = pl.multiple_of(g * _SUBLANES, _SUBLANES)
        p = p_ref[pl.ds(r0, _SUBLANES), :].astype(jnp.float32)
        y = y_ref[pl.ds(r0, _SUBLANES), :].astype(jnp.float32)
        if hard_labels:
            # Exact for {0,1} labels; one EUP log per element instead of two.
            bce = -jnp.maximum(jnp.log(jnp.where(y > 0.5, p, 1.0 - p)), _NEG_CLAMP)
        else:
            log_p = jnp.maximum(jnp.log(p), _NEG_CLAMP)
            log_1mp = jnp.maximum(jnp.log(1.0 - p), _NEG_CLAMP)
            # -(y*log_p + (1-y)*log_1mp) == -(log_1mp + y*(log_p - log_1mp))
            bce = -(log_1mp + y * (log_p - log_1mp))
        if need_mask:
            # Zero rows past the end of the (ragged) array AFTER the clamp so
            # out-of-bounds garbage / NaN never reaches the accumulator.
            row = base_row + r0 + lax.broadcasted_iota(
                jnp.int32, (_SUBLANES, _LANES), 0)
            bce = jnp.where(row < rows, bce, 0.0)
        return bce

    def body(g, acc):
        return acc + group_bce(g)

    unroll = next(u for u in (8, 4, 2, 1) if n_groups % u == 0)
    acc = lax.fori_loop(0, n_groups, body,
                        jnp.zeros((_SUBLANES, _LANES), jnp.float32),
                        unroll=unroll)
    out_ref[...] = acc


def p_hr_loss(peak_result, peak_labels, hr_result, hr_gt, *,
              hard_labels=False, max_block_rows=_MAX_BLOCK_ROWS):
    """Pallas implementation of P_HR_loss.forward. Returns a scalar float32."""
    n_peak = int(peak_result.size)
    n_hr = int(hr_result.size)

    # Lane-dense layout: flatten and view as (rows, 128) with rows a multiple
    # of 8.  Pad only up to the next (8,128) tile (<= 1023 zeros); if n_peak is
    # already 1024-aligned there is no copy at all (reshape is a bitcast).
    # Inputs keep their dtype (bf16 accepted as-is); the kernel upcasts to f32.
    p_flat = peak_result.reshape(-1)
    y_flat = peak_labels.reshape(-1)
    rows = pl.cdiv(n_peak, _LANES)
    rows = pl.cdiv(rows, _SUBLANES) * _SUBLANES
    padded = rows * _LANES
    if padded != n_peak:
        p_flat = jnp.pad(p_flat, (0, padded - n_peak))
        y_flat = jnp.pad(y_flat, (0, padded - n_peak))
    p2 = p_flat.reshape(rows, _LANES)
    y2 = y_flat.reshape(rows, _LANES)

    block_rows = max(_SUBLANES, min(int(max_block_rows), rows))
    block_rows -= block_rows % _SUBLANES
    num_blocks = pl.cdiv(rows, block_rows)

    kernel = functools.partial(_bce_partial_kernel, block_rows=block_rows,
                               rows=rows, hard_labels=hard_labels)

    partials = pl.pallas_call(
        kernel,
        out_shape=jax.ShapeDtypeStruct((num_blocks * _SUBLANES, _LANES),
                                       jnp.float32),
        grid_spec=pltpu.PrefetchScalarGridSpec(
            num_scalar_prefetch=0,
            grid=(num_blocks,),
            in_specs=[
                # TODO(synk): on v5e, if the single-log path makes this HBM
                # bound, add pipeline_mode=pl.Buffered(3) to these two specs.
                pl.BlockSpec((block_rows, _LANES), lambda i: (i, 0)),
                pl.BlockSpec((block_rows, _LANES), lambda i: (i, 0)),
            ],
            out_specs=pl.BlockSpec((_SUBLANES, _LANES), lambda i: (i, 0)),
        ),
        compiler_params=pltpu.CompilerParams(
            dimension_semantics=("parallel",),   # independent partials -> both v7x cores
        ),
    )(p2, y2)

    # Trivial epilogue: reduce the tiny lane-dense partial-sum slab and add the
    # L1 term over the tiny (B, 1) HR vectors.
    bce = jnp.sum(partials) * jnp.float32(1.0 / n_peak)
    l1 = jnp.sum(jnp.abs(hr_result.astype(jnp.float32) -
                         hr_gt.astype(jnp.float32))) * jnp.float32(1.0 / n_hr)
    return bce + l1


def _reference(peak_result, peak_labels, hr_result, hr_gt):
    p = peak_result.astype(jnp.float32)
    y = peak_labels.astype(jnp.float32)
    log_p = jnp.maximum(jnp.log(p), -100.0)
    log_1mp = jnp.maximum(jnp.log(1.0 - p), -100.0)
    bce = jnp.mean(-(y * log_p + (1.0 - y) * log_1mp))
    l1 = jnp.mean(jnp.abs(hr_result.astype(jnp.float32) - hr_gt.astype(jnp.float32)))
    return bce + l1


if __name__ == "__main__":
    key = jax.random.PRNGKey(0)
    k1, k2, k3, k4, k5, k6, k7, k8 = jax.random.split(key, 8)

    # Case 1: typical module shapes (batch=2, 128 time-steps), soft targets,
    # default exact two-log BCE path; single block.
    B, T = 2, 128
    peak_result = jax.nn.sigmoid(jax.random.normal(k1, (B, T), dtype=jnp.float32))
    peak_labels = jax.random.uniform(k2, (B, T), dtype=jnp.float32)   # soft targets in [0,1]
    hr_result = 60.0 + 20.0 * jax.random.normal(k3, (B, 1), dtype=jnp.float32)
    hr_gt = 60.0 + 20.0 * jax.random.normal(k4, (B, 1), dtype=jnp.float32)

    loss1 = jax.block_until_ready(p_hr_loss(peak_result, peak_labels, hr_result, hr_gt))
    ref1 = jax.block_until_ready(_reference(peak_result, peak_labels, hr_result, hr_gt))
    assert jnp.allclose(loss1, ref1, rtol=1e-5, atol=1e-5), (loss1, ref1)

    # Case 2: multi-block grid with a ragged last block (exercises the
    # in-kernel mask) plus hard {0,1} labels with the single-log fast path.
    B2, S, T2 = 3, 8, 128            # 3072 elems -> 24 rows of 128, blocks of 16
    p2 = jax.nn.sigmoid(jax.random.normal(k5, (B2, S, T2), dtype=jnp.float32))
    y2 = (jax.random.uniform(k6, (B2, S, T2)) > 0.5).astype(jnp.float32)
    hr_r2 = 60.0 + 20.0 * jax.random.normal(k7, (4, 1), dtype=jnp.float32)
    hr_g2 = 60.0 + 20.0 * jax.random.normal(k8, (4, 1), dtype=jnp.float32)

    loss2 = jax.block_until_ready(
        p_hr_loss(p2, y2, hr_r2, hr_g2, hard_labels=True, max_block_rows=16))
    ref2 = jax.block_until_ready(_reference(p2, y2, hr_r2, hr_g2))
    assert jnp.allclose(loss2, ref2, rtol=1e-5, atol=1e-5), (loss2, ref2)

    print("KERNEL_OK")
</pallas_src>

<mosaic_0001>
module attributes {stable_mosaic.version = 11 : i64} {
  func.func @_bce_partial_kernel(%arg0: i32, %arg1: memref<8x128xf32, #tpu.memory_space<vmem>>, %arg2: memref<8x128xf32, #tpu.memory_space<vmem>>, %arg3: memref<8x128xf32, #tpu.memory_space<vmem>>) attributes {dimension_semantics = [#tpu.dimension_semantics<parallel>], iteration_bounds = array<i64: 1>, scalar_prefetch = 0 : i64, scratch_operands = 0 : i64, tpu.core_type = #tpu.core_type<tc>, window_params = [{transform_indices = @transform_0, window_bounds = array<i64: 8, 128>}, {transform_indices = @transform_1, window_bounds = array<i64: 8, 128>}, {transform_indices = @transform_2, window_bounds = array<i64: 8, 128>}]} {
    %cst = arith.constant 0.000000e+00 : f32
    %0 = vector.broadcast %cst : f32 to vector<8x128xf32>
    %c0_i32 = arith.constant 0 : i32
    %c8_i32 = arith.constant 8 : i32
    %1 = arith.muli %c0_i32, %c8_i32 : i32
    %2 = tpu.assume_multiple %1, 8 : i32
    %3 = arith.index_cast %2 : i32 to index
    %c0 = arith.constant 0 : index
    %4 = vector.load %arg1[%3, %c0] : memref<8x128xf32, #tpu.memory_space<vmem>>, vector<8x128xf32>
    %5 = arith.index_cast %2 : i32 to index
    %c0_0 = arith.constant 0 : index
    %6 = vector.load %arg2[%5, %c0_0] : memref<8x128xf32, #tpu.memory_space<vmem>>, vector<8x128xf32>
    %7 = math.log %4 : vector<8x128xf32>
    %cst_1 = arith.constant -1.000000e+02 : f32
    %8 = vector.broadcast %cst_1 : f32 to vector<8x128xf32>
    %9 = arith.maximumf %7, %8 : vector<8x128xf32>
    %cst_2 = arith.constant 1.000000e+00 : f32
    %10 = vector.broadcast %cst_2 : f32 to vector<8x128xf32>
    %11 = arith.subf %10, %4 : vector<8x128xf32>
    %12 = math.log %11 : vector<8x128xf32>
    %cst_3 = arith.constant -1.000000e+02 : f32
    %13 = vector.broadcast %cst_3 : f32 to vector<8x128xf32>
    %14 = arith.maximumf %12, %13 : vector<8x128xf32>
    %15 = arith.subf %9, %14 : vector<8x128xf32>
    %16 = arith.mulf %6, %15 : vector<8x128xf32>
    %17 = arith.addf %14, %16 : vector<8x128xf32>
    %cst_4 = arith.constant 0.000000e+00 : f32
    %18 = vector.broadcast %cst_4 : f32 to vector<8x128xf32>
    %19 = arith.subf %18, %17 : vector<8x128xf32>
    %20 = arith.addf %0, %19 : vector<8x128xf32>
    %c1_i32 = arith.constant 1 : i32
    %c0_5 = arith.constant 0 : index
    %c0_6 = arith.constant 0 : index
    %21 = vector.load %arg3[%c0_5, %c0_6] : memref<8x128xf32, #tpu.memory_space<vmem>>, vector<8x128xf32>
    tpu.vector_store %arg3[%c0_5, %c0_6], %20 {strides = array<i32>} : memref<8x128xf32, #tpu.memory_space<vmem>>, vector<8x128xf32>,
    return
  }
  func.func @transform_0(%arg0: i32) -> (i32, i32) {
    %c0_i32 = arith.constant 0 : i32
    %c0_i32_0 = arith.constant 0 : i32
    return %arg0, %c0_i32 : i32, i32
  }
  func.func @transform_1(%arg0: i32) -> (i32, i32) {
    %c0_i32 = arith.constant 0 : i32
    %c0_i32_0 = arith.constant 0 : i32
    return %arg0, %c0_i32 : i32, i32
  }
  func.func @transform_2(%arg0: i32) -> (i32, i32) {
    %c0_i32 = arith.constant 0 : i32
    %c0_i32_0 = arith.constant 0 : i32
    return %arg0, %c0_i32 : i32, i32
  }
}

</mosaic_0001>

<llo_original>
// kernel: tpu_custom_call.1
$region0: #{tpu_custom_call.1}
  #allocation0 [shape = 'u32[]', space=smem, size = 0x4, offset = 0x4, fixed_abs, tag = 'smem constant byte address 0x4 - core index']
  #allocation1 [shape = 'u32[144,128]{1,0:T(1,128)}', space=vmem, size = 0x12000, scoped, tag = 'internal scratch']
  %s0 = inlined_call_operand.hbm [shape: f32[8,128], index: 0, kind: input, shape index: {}]
  %s1 = inlined_call_operand.hbm [shape: f32[8,128], index: 1, kind: input, shape index: {}]
  %s2 = inlined_call_operand.hbm [shape: f32[8,128], index: 2, kind: output, shape index: {}]
  %s3 = sld [smem:[#allocation0]]
  $region26: #{tpu_custom_call.1} parent=0
    _
  %s5 = ssub.s32 1, %s3
  %s6 = scalar_select 0, %s5, %s3
  $region1: #{tpu_custom_call.1} parent=0
    #allocation2 [shape = 'u8[4096]{0}', space=vmem, size = 0x1000, scoped, tag = 'input window, operand 0, single buffered']
    #allocation3 [shape = 's32[1]{0}', space=sflag, size = 0x4, scoped, tag = 'scoped memory for tpu_custom_call.1']
    #allocation4 [shape = 's32[1]{0}', space=sflag, size = 0x4, scoped, tag = 'scoped memory for tpu_custom_call.1']
    #allocation5 [shape = 'u8[4096]{0}', space=vmem, size = 0x1000, scoped, tag = 'input window, operand 1, single buffered']
    #allocation6 [shape = 's32[1]{0}', space=sflag, size = 0x4, scoped, tag = 'scoped memory for tpu_custom_call.1']
    #allocation7 [shape = 'u8[4096]{0}', space=vmem, size = 0x1000, scoped, tag = 'output window, operand 0, single buffered']
    %7 = vsyncpa [#allocation3], 0
    %8 = vsyncpa [#allocation6], 0
    %9 = vsyncpa [#allocation4], 0
    // Predicated region
    $region2: #{tpu_custom_call.1} parent=1 // pred_check
      _
    $region3: #{tpu_custom_call.1} parent=1 // pred_check_branch
      %11 = sbr.rel (0) target = $region5
    $region4: #{tpu_custom_call.1} parent=1 // pred_region
      %s13 = ssub.s32 128, 128
      %14 = vsyncadd [#allocation3], %s13
      %s16 = sshll.u32 [#allocation2], 4
      %s17 = int_to_ptr.vmem [resolvable:$true] %s16
      %19 = dma.hbm_to_vmem [thread:$0]  %s0, 128, %s17, [#allocation3]
    $region5: #{tpu_custom_call.1} parent=1 // pred_fallthru
      _
    // Predicated region
    $region6: #{tpu_custom_call.1} parent=1 // pred_check
      _
    $region7: #{tpu_custom_call.1} parent=1 // pred_check_branch
      %21 = sbr.rel (0) target = $region9
    $region8: #{tpu_custom_call.1} parent=1 // pred_region
      %s23 = ssub.s32 128, 128
      %24 = vsyncadd [#allocation6], %s23
      %s26 = sshll.u32 [#allocation5], 4
      %s27 = int_to_ptr.vmem [resolvable:$true] %s26
      %29 = dma.hbm_to_vmem [thread:$0]  %s1, 128, %s27, [#allocation6]
    $region9: #{tpu_custom_call.1} parent=1 // pred_fallthru
      _
    // Predicated region
    $region10: #{tpu_custom_call.1} parent=1 // pred_check
      _
    $region11: #{tpu_custom_call.1} parent=1 // pred_check_branch
      %31 = sbr.rel (0) target = $region13
    $region12: #{tpu_custom_call.1} parent=1 // pred_region
      %32 = dma.done [#allocation3], 128
    $region13: #{tpu_custom_call.1} parent=1 // pred_fallthru
      _
    // Predicated region
    $region14: #{tpu_custom_call.1} parent=1 // pred_check
      _
    $region15: #{tpu_custom_call.1} parent=1 // pred_check_branch
      %34 = sbr.rel (0) target = $region17
    $region16: #{tpu_custom_call.1} parent=1 // pred_region
      %35 = dma.done [#allocation6], 128
    $region17: #{tpu_custom_call.1} parent=1 // pred_fallthru
      _
    %v36 = vld [vmem:[#allocation2] sm:$0xff]
    %v37 = vld [vmem:[#allocation5] sm:$0xff]
    %v38 = vlog2.pop %v36
    %v39 = vmul.f32 %v38, 0.6931472
    %v40 = vmax.f32 %v39, -100.0
    %v41 = vsub.f32 1.0, %v36
    %v42 = vlog2.pop %v41
    %v43 = vmul.f32 %v42, 0.6931472
    %v44 = vmax.f32 %v43, -100.0
    %v45 = vsub.f32 %v40, %v44
    %v46 = vmul.f32 %v37, %v45
    %v47 = vadd.f32 %v44, %v46
    %v48 = vsub.f32 0.0, %v47
    %v49 = vadd.f32 %v48, 0.0
    %50 = vst [vmem:[#allocation7] sm:$0xff] %v49
    // Predicated region
    $region18: #{tpu_custom_call.1} parent=1 // pred_check
      _
    $region19: #{tpu_custom_call.1} parent=1 // pred_check_branch
      %52 = sbr.rel (0) target = $region21
    $region20: #{tpu_custom_call.1} parent=1 // pred_region
      %s54 = ssub.s32 128, 128
      %55 = vsyncadd [#allocation4], %s54
      %s57 = sshll.u32 [#allocation7], 4
      %s58 = int_to_ptr.vmem [resolvable:$true] %s57
      %60 = dma.vmem_to_hbm [thread:$0]  %s58, 128, %s2, [#allocation4]
    $region21: #{tpu_custom_call.1} parent=1 // pred_fallthru
      _
    // Predicated region
    $region22: #{tpu_custom_call.1} parent=1 // pred_check
      _
    $region23: #{tpu_custom_call.1} parent=1 // pred_check_branch
      %62 = sbr.rel (0) target = $region25
    $region24: #{tpu_custom_call.1} parent=1 // pred_region
      %63 = dma.done [#allocation4], 128
    $region25: #{tpu_custom_call.1} parent=1 // pred_fallthru
      _
    %64 = vsyncpa [#allocation3], 1
    %65 = vsyncpa [#allocation6], 1
    %66 = vsyncpa [#allocation4], 1

</llo_original>
